<compile_context>
chip_gen: v6e
topology: v6e:2x2x1
jax: 0.10.0
libtpu: 0.0.40
codegen_flags: <defaults>
</compile_context>

<pallas_src>
import math

import jax
import jax.numpy as jnp
from jax.experimental import pallas as pl
from jax.experimental.pallas import tpu as pltpu


_LANE = 128


# ----------------------------- kernel ----------------------------------------

def _add_bias_kernel(x_ref, b_ref, o_ref):
    # x_ref: (TR, TL).  b_ref is either a (1, TL) row (broadcast over sublanes)
    # or a (TR, 1) column (broadcast over lanes).  Plain add; VPU-only.
    o_ref[...] = x_ref[...] + b_ref[...]


# ----------------------------- chip / tiling helpers --------------------------

def _sublane_multiple(dtype):
    """Native sublane tile height: 8 for 4-byte, 16 for 2-byte, 32 for 1-byte."""
    itemsize = jnp.dtype(dtype).itemsize
    if itemsize >= 4:
        return 8
    if itemsize == 2:
        return 16
    return 32


def _chip_tuning():
    """Return (target_block_bytes, vmem_limit_bytes_or_None) per generation."""
    name = ""
    try:
        info = pltpu.get_tpu_info()
        name = str(getattr(info, "chip_version", "") or "").lower()
    except Exception:
        pass
    if "7" in name:
        # v7x: ~3.2 TB/s HBM -> bigger blocks to amortize the ~0.35us/step cost;
        # 64 MiB physical VMEM, so raise the 32 MiB scoped default explicitly.
        return 5 * 1024 * 1024, 44 * 1024 * 1024
    if "6" in name:
        # v6e: ~1.4 TB/s; 4 MiB blocks (16 MiB double-buffered x/out footprint)
        # fit the 32 MiB scoped default with headroom -- no flag change needed.
        return 4 * 1024 * 1024, None
    # v5e (16 MiB scoped-VMEM default, ~820 GB/s) and unknown chips: 2 MiB
    # blocks are already >90% amortized and guaranteed to fit.
    return 2 * 1024 * 1024, None


def _pick_tiles(R, L, dtype, target_bytes, bias_per_row):
    """Pick (row_tile, lane_tile) for a (R, L) array of `dtype`."""
    itemsize = jnp.dtype(dtype).itemsize
    sub = _sublane_multiple(dtype)
    padded_L = pl.cdiv(L, _LANE) * _LANE          # physical lane-padded width

    # Prefer the full lane axis (fully contiguous DMA, no ragged masked tail
    # tile); split lanes only if even one sublane group would blow the budget.
    if sub * padded_L * itemsize <= target_bytes:
        tl = L
    else:
        tl = max(_LANE, (target_bytes // (sub * itemsize)) // _LANE * _LANE)
        tl = min(tl, L)

    # Physical bytes of one block row: lane-padded x/out row, plus the
    # lane-padded (tr, 1) bias column when the bias is per-row.
    padded_tl = pl.cdiv(tl, _LANE) * _LANE
    row_bytes = (padded_tl + (_LANE if bias_per_row else 0)) * itemsize

    tr = (target_bytes // max(row_bytes, 1)) // sub * sub
    tr = max(sub, tr)
    if tr >= R:
        tr = R                                     # full dim is always legal

    # Ensure >= 2 grid steps when possible so v7x's two TensorCores both get
    # work; on single-core chips this costs one extra ~0.35us step at most.
    if pl.cdiv(R, tr) * pl.cdiv(L, tl) < 2 and R >= 2 * sub:
        tr = pl.cdiv(pl.cdiv(R, 2), sub) * sub
    return tr, tl


# ----------------------------- pallas_call wrapper -----------------------------

def _pallas_bias_add_2d(x2d, bias2d):
    """Tiled, double-buffered add of a bias row (1, L) or bias column (R, 1)."""
    R, L = x2d.shape
    itemsize = jnp.dtype(x2d.dtype).itemsize
    target_bytes, vmem_limit = _chip_tuning()

    bias_per_row = bias2d.shape[0] != 1            # (R, 1) column vs (1, L) row
    tr, tl = _pick_tiles(R, L, x2d.dtype, target_bytes, bias_per_row)
    grid = (pl.cdiv(R, tr), pl.cdiv(L, tl))

    if bias_per_row:
        b_spec = pl.BlockSpec((tr, 1), lambda i, j: (i, 0))
    else:
        b_spec = pl.BlockSpec((1, tl), lambda i, j: (0, j))

    cp_kwargs = dict(dimension_semantics=("parallel", "parallel"))
    if vmem_limit is not None:
        cp_kwargs["vmem_limit_bytes"] = vmem_limit

    # Purely memory-bound: read x + bias, write out.
    cost = pl.CostEstimate(
        flops=R * L,
        transcendentals=0,
        bytes_accessed=2 * R * L * itemsize + bias2d.size * itemsize,
    )

    return pl.pallas_call(
        _add_bias_kernel,
        out_shape=jax.ShapeDtypeStruct((R, L), x2d.dtype),
        grid_spec=pltpu.PrefetchScalarGridSpec(
            num_scalar_prefetch=0,
            grid=grid,
            in_specs=[
                pl.BlockSpec((tr, tl), lambda i, j: (i, j)),
                b_spec,
            ],
            out_specs=pl.BlockSpec((tr, tl), lambda i, j: (i, j)),
        ),
        compiler_params=pltpu.CompilerParams(**cp_kwargs),
        cost_estimate=cost,
    )(x2d, bias2d)


# ----------------------------- public wrapper ----------------------------------

def add_bias(x, bias_param, *, pallas_min_elements=512 * 1024):
    """Pallas equivalent of AddBias.forward.

    Args:
      x: (B, N) or (B, C, H, W) array (NCHW for 4-D).
      bias_param: (N, 1) array, mirroring nn.Parameter(bias.unsqueeze(1)).
      pallas_min_elements: inputs smaller than this many elements use a plain
        XLA add (kernel launch + per-step cost dwarfs the traffic at KB scale).
        Pass 0 to force the Pallas kernel.
    """
    # Note: bias is cast to x.dtype (PyTorch would promote x instead for
    # lower-precision x with an f32 parameter); acceptable for this module.
    bias = bias_param.reshape(-1).astype(x.dtype)   # (N,) / (C,)

    if x.ndim == 2:
        B, N = x.shape
        if x.size < pallas_min_elements:
            return x + bias.reshape(1, N)           # XLA fallback for tiny inputs

        if N < _LANE:
            # Lane-dense repack for ANY small feature dim: rows of
            # g = lcm(N, 128) flattened elements share the same bias pattern,
            # so pad the batch axis by at most 128/gcd(N,128)-1 rows
            # (negligible) and reshape -- every store uses all 128 lanes.
            g = N * _LANE // math.gcd(N, _LANE)     # lcm(N, 128)
            row_mult = g // N                       # x-rows per repacked row
            Bp = pl.cdiv(B, row_mult) * row_mult
            xp = x if Bp == B else jnp.pad(x, ((0, Bp - B), (0, 0)))
            x2 = xp.reshape(Bp * N // g, g)
            b2 = jnp.tile(bias, g // N).reshape(1, g)
            y = _pallas_bias_add_2d(x2, b2).reshape(Bp, N)
            return y if Bp == B else y[:B]

        # General case (N >= 128): (1, N) bias row broadcast over row tiles.
        return _pallas_bias_add_2d(x, bias.reshape(1, N))

    elif x.ndim == 4:
        B, C, H, W = x.shape
        if x.size < pallas_min_elements:
            return x + bias.reshape(1, C, 1, 1)     # XLA fallback for tiny inputs

        # Flatten to (B*C, H*W): the per-channel bias becomes a per-row column
        # (row r = b*C + c -> bias[c]).  Rows are tiled in dtype-native sublane
        # multiples and the lane axis is kept whole when it fits the budget.
        x2 = x.reshape(B * C, H * W)
        b2 = jnp.tile(bias, (B,)).reshape(B * C, 1)
        return _pallas_bias_add_2d(x2, b2).reshape(B, C, H, W)

    else:
        raise ValueError(f"AddBias expects 2-D or 4-D input, got ndim={x.ndim}")


# ----------------------------- main --------------------------------------------

if __name__ == "__main__":
    key = jax.random.PRNGKey(0)
    k1, k2, k3, k4, k5, k6, k7 = jax.random.split(key, 7)

    C = 4  # feature / channel dim

    # deterministic "parameter": shape (C, 1), matching bias.unsqueeze(1)
    bias_param = jax.random.normal(k1, (C, 1), dtype=jnp.float32)

    # 4-D path: NCHW input -> flattened (B*C, H*W) lane-dense kernel
    x4 = jax.random.normal(k2, (2, C, 16, 16), dtype=jnp.float32)
    y4 = jax.block_until_ready(add_bias(x4, bias_param, pallas_min_elements=0))
    ref4 = x4 + bias_param.reshape(1, C, 1, 1)
    assert y4.shape == x4.shape and y4.dtype == x4.dtype
    assert jnp.allclose(y4, ref4, atol=1e-6), "4-D AddBias mismatch"

    # 2-D path, tiny N (lane-dense lcm repack with row padding)
    x2 = jax.random.normal(k3, (2, C), dtype=jnp.float32)
    y2 = jax.block_until_ready(add_bias(x2, bias_param, pallas_min_elements=0))
    ref2 = x2 + bias_param.reshape(1, C)
    assert y2.shape == x2.shape and y2.dtype == x2.dtype
    assert jnp.allclose(y2, ref2, atol=1e-6), "2-D AddBias mismatch"

    # 2-D path, N = 32 (128 % N == 0, exact repack, no padding)
    Nw = 32
    bias_w = jax.random.normal(k4, (Nw, 1), dtype=jnp.float32)
    xw = jax.random.normal(k5, (64, Nw), dtype=jnp.float32)
    yw = jax.block_until_ready(add_bias(xw, bias_w, pallas_min_elements=0))
    refw = xw + bias_w.reshape(1, Nw)
    assert yw.shape == xw.shape and yw.dtype == xw.dtype
    assert jnp.allclose(yw, refw, atol=1e-6), "2-D (lane-dense) AddBias mismatch"

    # 2-D path, N = 48 (128 % N != 0): new lcm repack with batch-row padding
    Nr = 48
    bias_r = jax.random.normal(k6, (Nr, 1), dtype=jnp.float32)
    xr = jax.random.normal(k7, (10, Nr), dtype=jnp.float32)
    yr = jax.block_until_ready(add_bias(xr, bias_r, pallas_min_elements=0))
    refr = xr + bias_r.reshape(1, Nr)
    assert yr.shape == xr.shape and yr.dtype == xr.dtype
    assert jnp.allclose(yr, refr, atol=1e-6), "2-D (lcm repack) AddBias mismatch"

    # 2-D path, N >= 128 (general row-tiled path, exercises the >=2-step split)
    xl = jax.random.normal(k5, (256, 256), dtype=jnp.float32)
    bias_l = jax.random.normal(k4, (256, 1), dtype=jnp.float32)
    yl = jax.block_until_ready(add_bias(xl, bias_l, pallas_min_elements=0))
    refl = xl + bias_l.reshape(1, 256)
    assert jnp.allclose(yl, refl, atol=1e-6), "2-D (wide) AddBias mismatch"

    # 4-D bf16 path (dtype-aware sublane multiple of 16)
    x4b = x4.astype(jnp.bfloat16)
    y4b = jax.block_until_ready(add_bias(x4b, bias_param, pallas_min_elements=0))
    ref4b = x4b + bias_param.astype(jnp.bfloat16).reshape(1, C, 1, 1)
    assert y4b.shape == x4b.shape and y4b.dtype == jnp.bfloat16
    assert jnp.allclose(y4b.astype(jnp.float32), ref4b.astype(jnp.float32),
                        atol=1e-2), "4-D bf16 AddBias mismatch"

    # Default-threshold call: KB-scale input takes the fused XLA fallback
    yf = jax.block_until_ready(add_bias(x4, bias_param))
    assert jnp.allclose(yf, ref4, atol=1e-6), "fallback AddBias mismatch"

    print("KERNEL_OK")
</pallas_src>

<mosaic_0001>
module attributes {stable_mosaic.version = 11 : i64} {
  func.func @_add_bias_kernel(%arg0: i32, %arg1: i32, %arg2: memref<8x256xf32, #tpu.memory_space<vmem>>, %arg3: memref<8x1xf32, #tpu.memory_space<vmem>>, %arg4: memref<8x256xf32, #tpu.memory_space<vmem>>) attributes {dimension_semantics = [#tpu.dimension_semantics<parallel>, #tpu.dimension_semantics<parallel>], iteration_bounds = array<i64: 1, 1>, scalar_prefetch = 0 : i64, scratch_operands = 0 : i64, tpu.core_type = #tpu.core_type<tc>, window_params = [{transform_indices = @transform_0, window_bounds = array<i64: 8, 256>}, {transform_indices = @transform_1, window_bounds = array<i64: 8, 1>}, {transform_indices = @transform_2, window_bounds = array<i64: 8, 256>}]} {
    %c0 = arith.constant 0 : index
    %c0_0 = arith.constant 0 : index
    %0 = vector.load %arg2[%c0, %c0_0] : memref<8x256xf32, #tpu.memory_space<vmem>>, vector<8x256xf32>
    %c0_1 = arith.constant 0 : index
    %c0_2 = arith.constant 0 : index
    %1 = vector.load %arg3[%c0_1, %c0_2] : memref<8x1xf32, #tpu.memory_space<vmem>>, vector<8x1xf32>
    %2 = vector.broadcast %1 : vector<8x1xf32> to vector<8x256xf32>
    %3 = arith.addf %0, %2 : vector<8x256xf32>
    %c0_3 = arith.constant 0 : index
    %c0_4 = arith.constant 0 : index
    %4 = vector.load %arg4[%c0_3, %c0_4] : memref<8x256xf32, #tpu.memory_space<vmem>>, vector<8x256xf32>
    tpu.vector_store %arg4[%c0_3, %c0_4], %3 {strides = array<i32>} : memref<8x256xf32, #tpu.memory_space<vmem>>, vector<8x256xf32>,
    return
  }
  func.func @transform_0(%arg0: i32, %arg1: i32) -> (i32, i32) {
    %c0_i32 = arith.constant 0 : i32
    return %arg0, %arg1 : i32, i32
  }
  func.func @transform_1(%arg0: i32, %arg1: i32) -> (i32, i32) {
    %c0_i32 = arith.constant 0 : i32
    %c0_i32_0 = arith.constant 0 : i32
    return %arg0, %c0_i32 : i32, i32
  }
  func.func @transform_2(%arg0: i32, %arg1: i32) -> (i32, i32) {
    %c0_i32 = arith.constant 0 : i32
    return %arg0, %arg1 : i32, i32
  }
}

</mosaic_0001>

<llo_original>
// kernel: tpu_custom_call.1
$region0: #{tpu_custom_call.1}
  #allocation0 [shape = 'u32[]', space=smem, size = 0x4, offset = 0x4, fixed_abs, tag = 'smem constant byte address 0x4 - core index']
  #allocation1 [shape = 'u32[144,128]{1,0:T(1,128)}', space=vmem, size = 0x12000, scoped, tag = 'internal scratch']
  %s0 = inlined_call_operand.hbm [shape: f32[8,256], index: 0, kind: input, shape index: {}]
  %s1 = inlined_call_operand.vmem [shape: f32[8,1], index: 1, kind: input, shape index: {}]
  %s2 = inlined_call_operand.hbm [shape: f32[8,256], index: 2, kind: output, shape index: {}]
  %s3 = sld [smem:[#allocation0]]
  $region22: #{tpu_custom_call.1} parent=0
    _
  %s5 = ssub.s32 1, %s3
  %s6 = scalar_select 0, %s5, %s3
  $region1: #{tpu_custom_call.1} parent=0
    #allocation2 [shape = 'u8[8192]{0}', space=vmem, size = 0x2000, scoped, tag = 'input window, operand 0, single buffered']
    #allocation3 [shape = 's32[1]{0}', space=sflag, size = 0x4, scoped, tag = 'scoped memory for tpu_custom_call.1']
    #allocation4 [shape = 's32[1]{0}', space=sflag, size = 0x4, scoped, tag = 'scoped memory for tpu_custom_call.1']
    #allocation5 [shape = 'u8[8192]{0}', space=vmem, size = 0x2000, scoped, tag = 'output window, operand 0, single buffered']
    %7 = vsyncpa [#allocation3], 0
    %8 = vsyncpa [#allocation4], 0
    // Predicated region
    $region2: #{tpu_custom_call.1} parent=1 // pred_check
      _
    $region3: #{tpu_custom_call.1} parent=1 // pred_check_branch
      %10 = sbr.rel (0) target = $region5
    $region4: #{tpu_custom_call.1} parent=1 // pred_region
      %s12 = ssub.s32 256, 256
      %13 = vsyncadd [#allocation3], %s12
      %s15 = sshll.u32 [#allocation2], 4
      %s16 = int_to_ptr.vmem [resolvable:$true] %s15
      %18 = dma.hbm_to_vmem [thread:$0]  %s0, 256, %s16, [#allocation3]
    $region5: #{tpu_custom_call.1} parent=1 // pred_fallthru
      _
    // Predicated region
    $region6: #{tpu_custom_call.1} parent=1 // pred_check
      _
    $region7: #{tpu_custom_call.1} parent=1 // pred_check_branch
      %20 = sbr.rel (0) target = $region9
    $region8: #{tpu_custom_call.1} parent=1 // pred_region
      _
    $region9: #{tpu_custom_call.1} parent=1 // pred_fallthru
      _
    // Predicated region
    $region10: #{tpu_custom_call.1} parent=1 // pred_check
      _
    $region11: #{tpu_custom_call.1} parent=1 // pred_check_branch
      %22 = sbr.rel (0) target = $region13
    $region12: #{tpu_custom_call.1} parent=1 // pred_region
      %23 = dma.done [#allocation3], 256
    $region13: #{tpu_custom_call.1} parent=1 // pred_fallthru
      _
    %v24 = vld [vmem:[#allocation2] sm:$0xff]
    %v25 = vld [vmem:[#allocation2 + $0x8] sm:$0xff]
    %v26 = vld [vmem:[%s1] sm:$0xff]
    %28 = vset.pattern.permute.xlu0 0
    %29 = vperm.xlu0 %28, %v26
    %v30 = vpop.permute.xlu0 %29
    %v32 = vadd.f32 %v24, %v30
    %v33 = vadd.f32 %v25, %v30
    %34 = vst [vmem:[#allocation5] sm:$0xff] %v32
    %35 = vst [vmem:[#allocation5 + $0x8] sm:$0xff] %v33
    // Predicated region
    $region14: #{tpu_custom_call.1} parent=1 // pred_check
      _
    $region15: #{tpu_custom_call.1} parent=1 // pred_check_branch
      %37 = sbr.rel (0) target = $region17
    $region16: #{tpu_custom_call.1} parent=1 // pred_region
      %s39 = ssub.s32 256, 256
      %40 = vsyncadd [#allocation4], %s39
      %s42 = sshll.u32 [#allocation5], 4
      %s43 = int_to_ptr.vmem [resolvable:$true] %s42
      %45 = dma.vmem_to_hbm [thread:$0]  %s43, 256, %s2, [#allocation4]
    $region17: #{tpu_custom_call.1} parent=1 // pred_fallthru
      _
    // Predicated region
    $region18: #{tpu_custom_call.1} parent=1 // pred_check
      _
    $region19: #{tpu_custom_call.1} parent=1 // pred_check_branch
      %47 = sbr.rel (0) target = $region21
    $region20: #{tpu_custom_call.1} parent=1 // pred_region
      %48 = dma.done [#allocation4], 256
    $region21: #{tpu_custom_call.1} parent=1 // pred_fallthru
      _
    %49 = vsyncpa [#allocation3], 1
    %50 = vsyncpa [#allocation4], 1

</llo_original>
